<compile_context>
chip_gen: v6e
topology: v6e:2x2x1
jax: 0.10.0
libtpu: 0.0.40
codegen_flags: <defaults>
</compile_context>

<pallas_src>
import functools

import jax
import jax.numpy as jnp
from jax.experimental import pallas as pl
from jax.experimental.pallas import tpu as pltpu

SMALL_VALUE = 1e-6


def _fbeta_rows_kernel(logits_ref, labels_ref, fs_ref, *, beta, batch_tile,
                       total_rows):
    """Per-row soft F-beta score for one batch tile. fs_ref: (batch_tile, 1) f32."""
    logits = logits_ref[...].astype(jnp.float32)
    labels = labels_ref[...].astype(jnp.float32)

    p = jax.nn.sigmoid(logits)                                    # F.sigmoid(logits)
    num_pos = jnp.sum(p, axis=1, keepdims=True) + SMALL_VALUE      # sum(p, 1) + eps
    num_pos_hat = jnp.sum(labels, axis=1, keepdims=True) + SMALL_VALUE
    tp = jnp.sum(labels * p, axis=1, keepdims=True)                # sum(l*p, 1)

    precise = tp / num_pos
    recall = tp / num_pos_hat
    b2 = beta * beta
    fs = (1.0 + b2) * precise * recall / (b2 * precise + recall + SMALL_VALUE)

    if total_rows % batch_tile != 0:
        # Tail tile: rows past the real batch hold unspecified padded data;
        # force their contribution to exactly zero (jnp.where also kills any
        # NaN/Inf produced from garbage in the padded region).
        row = jax.lax.broadcasted_iota(jnp.int32, (batch_tile, 1), 0)
        row = row + pl.program_id(0) * batch_tile
        fs = jnp.where(row < total_rows, fs, 0.0)

    fs_ref[...] = fs


def _vmem_capacity_bytes():
    try:
        return int(pltpu.get_tpu_info().vmem_capacity_bytes)
    except Exception:
        return 64 * 1024 * 1024  # conservative fallback (v7x per-core physical)


def _choose_batch_tile(B, C, itemsize_logits, itemsize_labels, max_batch_tile):
    """Largest batch tile such that double-buffered input tiles use <= 1/4 of VMEM."""
    vmem_cap = _vmem_capacity_bytes()
    tile_budget = vmem_cap // 4                      # for 2 inputs x 2 buffers
    per_row_bytes = C * (itemsize_logits + itemsize_labels)
    rows = tile_budget // (2 * per_row_bytes)        # 2 pipeline buffers per input
    rows = min(int(rows), 1024)                      # diminishing returns past this
    if max_batch_tile is not None:
        rows = min(rows, int(max_batch_tile))
    # sublane alignment: 8 for 4-byte dtypes, 16 for 2-byte, 32 for 1-byte.
    align = {4: 8, 2: 16, 1: 32}.get(min(itemsize_logits, itemsize_labels), 8)
    rows = max(align, (rows // align) * align)
    if rows >= B:
        rows = B                                     # single block = full batch dim
    return rows, vmem_cap


def fbeta_loss(logits, labels, beta=1.0, *, max_batch_tile=None):
    """Pallas implementation of FbetaLoss.forward. Returns a scalar f32."""
    B, C = logits.shape
    assert labels.shape == (B, C)

    it_l = logits.dtype.itemsize
    it_y = labels.dtype.itemsize
    batch_tile, vmem_cap = _choose_batch_tile(B, C, it_l, it_y, max_batch_tile)
    grid = (pl.cdiv(B, batch_tile),)

    # Scoped-VMEM limit: what the tiles need (x2 headroom), at least 32 MiB,
    # never above physical capacity. Generation-aware via get_tpu_info.
    needed = 2 * 2 * batch_tile * C * (it_l + it_y) + 2 * 2 * batch_tile * 4
    vmem_limit = min(vmem_cap, max(2 * needed, 32 * 1024 * 1024))

    kernel = functools.partial(
        _fbeta_rows_kernel, beta=float(beta), batch_tile=batch_tile, total_rows=B
    )

    fs_rows = pl.pallas_call(
        kernel,
        out_shape=jax.ShapeDtypeStruct((B, 1), jnp.float32),
        grid_spec=pltpu.PrefetchScalarGridSpec(
            num_scalar_prefetch=0,
            grid=grid,
            in_specs=[
                pl.BlockSpec((batch_tile, C), lambda i: (i, 0)),
                pl.BlockSpec((batch_tile, C), lambda i: (i, 0)),
            ],
            out_specs=pl.BlockSpec((batch_tile, 1), lambda i: (i, 0)),
        ),
        compiler_params=pltpu.CompilerParams(
            dimension_semantics=("parallel",),   # no carried state -> shard across TCs
            vmem_limit_bytes=vmem_limit,
        ),
        cost_estimate=pl.CostEstimate(
            flops=5 * B * C,
            transcendentals=B * C,               # sigmoid
            bytes_accessed=B * C * (it_l + it_y) + B * 4,
        ),
    )(logits, labels)

    # Tiny final reduction in f32 in the wrapper (matches fs.sum() / batch_size).
    return 1.0 - jnp.sum(fs_rows) / B


def fbeta_loss_ref(logits, labels, beta=1.0):
    """Pure-JAX reference matching the PyTorch module exactly."""
    B = logits.shape[0]
    p = jax.nn.sigmoid(logits.astype(jnp.float32))
    l = labels.astype(jnp.float32)
    num_pos = jnp.sum(p, axis=1) + SMALL_VALUE
    num_pos_hat = jnp.sum(l, axis=1) + SMALL_VALUE
    tp = jnp.sum(l * p, axis=1)
    precise = tp / num_pos
    recall = tp / num_pos_hat
    b2 = beta * beta
    fs = (1.0 + b2) * precise * recall / (b2 * precise + recall + SMALL_VALUE)
    return 1.0 - jnp.sum(fs) / B


if __name__ == "__main__":
    key = jax.random.PRNGKey(0)
    k1, k2, k3, k4 = jax.random.split(key, 4)

    # Test 1: f32 inputs, notebook-style batch (batch_size=32), single tile.
    B, C = 32, 256
    logits = jax.random.normal(k1, (B, C), dtype=jnp.float32)
    labels = (jax.random.uniform(k2, (B, C)) < 0.1).astype(jnp.float32)
    loss = jax.block_until_ready(fbeta_loss(logits, labels, beta=1.0))
    ref = jax.block_until_ready(fbeta_loss_ref(logits, labels, beta=1.0))
    assert jnp.allclose(loss, ref, rtol=1e-5, atol=1e-5), (loss, ref)

    # Test 2: bf16 inputs (half HBM traffic), B not divisible by the tile size
    # -> exercises pl.cdiv grid + tail-row masking on the parallel grid.
    B2, C2 = 50, 384
    logits2 = jax.random.normal(k3, (B2, C2), dtype=jnp.float32).astype(jnp.bfloat16)
    labels2 = (jax.random.uniform(k4, (B2, C2)) < 0.1).astype(jnp.bfloat16)
    loss2 = jax.block_until_ready(
        fbeta_loss(logits2, labels2, beta=2.0, max_batch_tile=16)
    )
    ref2 = jax.block_until_ready(fbeta_loss_ref(logits2, labels2, beta=2.0))
    assert jnp.allclose(loss2, ref2, rtol=1e-5, atol=1e-5), (loss2, ref2)

    print("KERNEL_OK")
</pallas_src>

<mosaic_0001>
module attributes {stable_mosaic.version = 11 : i64} {
  func.func @_fbeta_rows_kernel(%arg0: i32, %arg1: memref<32x256xf32, #tpu.memory_space<vmem>>, %arg2: memref<32x256xf32, #tpu.memory_space<vmem>>, %arg3: memref<32x1xf32, #tpu.memory_space<vmem>>) attributes {dimension_semantics = [#tpu.dimension_semantics<parallel>], iteration_bounds = array<i64: 1>, scalar_prefetch = 0 : i64, scratch_operands = 0 : i64, tpu.core_type = #tpu.core_type<tc>, window_params = [{transform_indices = @transform_0, window_bounds = array<i64: 32, 256>}, {transform_indices = @transform_1, window_bounds = array<i64: 32, 256>}, {transform_indices = @transform_2, window_bounds = array<i64: 32, 1>}]} {
    %c0 = arith.constant 0 : index
    %c0_0 = arith.constant 0 : index
    %0 = vector.load %arg1[%c0, %c0_0] : memref<32x256xf32, #tpu.memory_space<vmem>>, vector<32x256xf32>
    %c0_1 = arith.constant 0 : index
    %c0_2 = arith.constant 0 : index
    %1 = vector.load %arg2[%c0_1, %c0_2] : memref<32x256xf32, #tpu.memory_space<vmem>>, vector<32x256xf32>
    %2 = arith.negf %0 : vector<32x256xf32>
    %3 = math.exp %2 : vector<32x256xf32>
    %cst = arith.constant 1.000000e+00 : f32
    %4 = vector.broadcast %cst : f32 to vector<32x256xf32>
    %5 = arith.addf %4, %3 : vector<32x256xf32>
    %6 = arith.divf %4, %5 : vector<32x256xf32>
    %cst_3 = arith.constant dense<0.000000e+00> : vector<32xf32>
    %7 = vector.multi_reduction <add>, %6, %cst_3 [1] : vector<32x256xf32> to vector<32xf32>
    %8 = vector.shape_cast %7 : vector<32xf32> to vector<32x1xf32>
    %cst_4 = arith.constant 9.99999997E-7 : f32
    %9 = vector.broadcast %cst_4 : f32 to vector<32x1xf32>
    %10 = arith.addf %8, %9 : vector<32x1xf32>
    %cst_5 = arith.constant dense<0.000000e+00> : vector<32xf32>
    %11 = vector.multi_reduction <add>, %1, %cst_5 [1] : vector<32x256xf32> to vector<32xf32>
    %12 = vector.shape_cast %11 : vector<32xf32> to vector<32x1xf32>
    %cst_6 = arith.constant 9.99999997E-7 : f32
    %13 = vector.broadcast %cst_6 : f32 to vector<32x1xf32>
    %14 = arith.addf %12, %13 : vector<32x1xf32>
    %15 = arith.mulf %1, %6 : vector<32x256xf32>
    %cst_7 = arith.constant dense<0.000000e+00> : vector<32xf32>
    %16 = vector.multi_reduction <add>, %15, %cst_7 [1] : vector<32x256xf32> to vector<32xf32>
    %17 = vector.shape_cast %16 : vector<32xf32> to vector<32x1xf32>
    %18 = arith.divf %17, %10 : vector<32x1xf32>
    %19 = arith.divf %17, %14 : vector<32x1xf32>
    %cst_8 = arith.constant 2.000000e+00 : f32
    %20 = vector.broadcast %cst_8 : f32 to vector<32x1xf32>
    %21 = arith.mulf %20, %18 : vector<32x1xf32>
    %22 = arith.mulf %21, %19 : vector<32x1xf32>
    %cst_9 = arith.constant 1.000000e+00 : f32
    %23 = vector.broadcast %cst_9 : f32 to vector<32x1xf32>
    %24 = arith.mulf %23, %18 : vector<32x1xf32>
    %25 = arith.addf %24, %19 : vector<32x1xf32>
    %cst_10 = arith.constant 9.99999997E-7 : f32
    %26 = vector.broadcast %cst_10 : f32 to vector<32x1xf32>
    %27 = arith.addf %25, %26 : vector<32x1xf32>
    %28 = arith.divf %22, %27 : vector<32x1xf32>
    %c0_11 = arith.constant 0 : index
    %c0_12 = arith.constant 0 : index
    %29 = vector.load %arg3[%c0_11, %c0_12] : memref<32x1xf32, #tpu.memory_space<vmem>>, vector<32x1xf32>
    tpu.vector_store %arg3[%c0_11, %c0_12], %28 {strides = array<i32>} : memref<32x1xf32, #tpu.memory_space<vmem>>, vector<32x1xf32>,
    return
  }
  func.func @transform_0(%arg0: i32) -> (i32, i32) {
    %c0_i32 = arith.constant 0 : i32
    %c0_i32_0 = arith.constant 0 : i32
    return %arg0, %c0_i32 : i32, i32
  }
  func.func @transform_1(%arg0: i32) -> (i32, i32) {
    %c0_i32 = arith.constant 0 : i32
    %c0_i32_0 = arith.constant 0 : i32
    return %arg0, %c0_i32 : i32, i32
  }
  func.func @transform_2(%arg0: i32) -> (i32, i32) {
    %c0_i32 = arith.constant 0 : i32
    %c0_i32_0 = arith.constant 0 : i32
    return %arg0, %c0_i32 : i32, i32
  }
}

</mosaic_0001>

<llo_original>
// kernel: tpu_custom_call.1
$region0: #{tpu_custom_call.1}
  #allocation0 [shape = 'u32[]', space=smem, size = 0x4, offset = 0x4, fixed_abs, tag = 'smem constant byte address 0x4 - core index']
  #allocation1 [shape = 'u32[144,128]{1,0:T(1,128)}', space=vmem, size = 0x12000, scoped, tag = 'internal scratch']
  %s0 = inlined_call_operand.hbm [shape: f32[32,256], index: 0, kind: input, shape index: {}]
  %s1 = inlined_call_operand.hbm [shape: f32[32,256], index: 1, kind: input, shape index: {}]
  %s2 = inlined_call_operand.vmem [shape: f32[32,1], index: 2, kind: output, shape index: {}]
  %s3 = sld [smem:[#allocation0]]
  $region26: #{tpu_custom_call.1} parent=0
    _
  %s5 = ssub.s32 1, %s3
  %s6 = scalar_select 0, %s5, %s3
  $region1: #{tpu_custom_call.1} parent=0
    #allocation2 [shape = 'u8[32768]{0}', space=vmem, size = 0x8000, scoped, tag = 'input window, operand 0, single buffered']
    #allocation3 [shape = 's32[1]{0}', space=sflag, size = 0x4, scoped, tag = 'scoped memory for tpu_custom_call.1']
    #allocation4 [shape = 'u8[32768]{0}', space=vmem, size = 0x8000, scoped, tag = 'input window, operand 1, single buffered']
    #allocation5 [shape = 's32[1]{0}', space=sflag, size = 0x4, scoped, tag = 'scoped memory for tpu_custom_call.1']
    %7 = vsyncpa [#allocation3], 0
    %8 = vsyncpa [#allocation5], 0
    // Predicated region
    $region2: #{tpu_custom_call.1} parent=1 // pred_check
      _
    $region3: #{tpu_custom_call.1} parent=1 // pred_check_branch
      %10 = sbr.rel (0) target = $region5
    $region4: #{tpu_custom_call.1} parent=1 // pred_region
      %s12 = ssub.s32 1024, 1024
      %13 = vsyncadd [#allocation3], %s12
      %s14 = sshll.u32 [#allocation2], 4
      %s15 = int_to_ptr.vmem [resolvable:$true] %s14
      %20 = dma.hbm_to_vmem [thread:$0]  %s0, 1024, %s15, [#allocation3], 256, 256, 16
    $region5: #{tpu_custom_call.1} parent=1 // pred_fallthru
      _
    // Predicated region
    $region6: #{tpu_custom_call.1} parent=1 // pred_check
      _
    $region7: #{tpu_custom_call.1} parent=1 // pred_check_branch
      %22 = sbr.rel (0) target = $region9
    $region8: #{tpu_custom_call.1} parent=1 // pred_region
      %s24 = ssub.s32 1024, 1024
      %25 = vsyncadd [#allocation5], %s24
      %s26 = sshll.u32 [#allocation4], 4
      %s27 = int_to_ptr.vmem [resolvable:$true] %s26
      %32 = dma.hbm_to_vmem [thread:$0]  %s1, 1024, %s27, [#allocation5], 256, 256, 16
    $region9: #{tpu_custom_call.1} parent=1 // pred_fallthru
      _
    // Predicated region
    $region10: #{tpu_custom_call.1} parent=1 // pred_check
      _
    $region11: #{tpu_custom_call.1} parent=1 // pred_check_branch
      %34 = sbr.rel (0) target = $region13
    $region12: #{tpu_custom_call.1} parent=1 // pred_region
      %35 = dma.done [#allocation3], 1024
    $region13: #{tpu_custom_call.1} parent=1 // pred_fallthru
      _
    // Predicated region
    $region14: #{tpu_custom_call.1} parent=1 // pred_check
      _
    $region15: #{tpu_custom_call.1} parent=1 // pred_check_branch
      %37 = sbr.rel (0) target = $region17
    $region16: #{tpu_custom_call.1} parent=1 // pred_region
      %38 = dma.done [#allocation5], 1024
    $region17: #{tpu_custom_call.1} parent=1 // pred_fallthru
      _
    %v39 = vld [vmem:[#allocation2] sm:$0xff]
    %v40 = vld [vmem:[#allocation2 + $0x8] sm:$0xff]
    %v41 = vld [vmem:[#allocation2 + $0x10] sm:$0xff]
    %v42 = vld [vmem:[#allocation2 + $0x18] sm:$0xff]
    %v43 = vld [vmem:[#allocation2 + $0x20] sm:$0xff]
    %v44 = vld [vmem:[#allocation2 + $0x28] sm:$0xff]
    %v45 = vld [vmem:[#allocation2 + $0x30] sm:$0xff]
    %v46 = vld [vmem:[#allocation2 + $0x38] sm:$0xff]
    %v47 = vld [vmem:[#allocation4] sm:$0xff]
    %v48 = vld [vmem:[#allocation4 + $0x8] sm:$0xff]
    %v49 = vld [vmem:[#allocation4 + $0x10] sm:$0xff]
    %v50 = vld [vmem:[#allocation4 + $0x18] sm:$0xff]
    %v51 = vld [vmem:[#allocation4 + $0x20] sm:$0xff]
    %v52 = vld [vmem:[#allocation4 + $0x28] sm:$0xff]
    %v53 = vld [vmem:[#allocation4 + $0x30] sm:$0xff]
    %v54 = vld [vmem:[#allocation4 + $0x38] sm:$0xff]
    %v55 = vxor.u32 %v39, 2147483648
    %v56 = vxor.u32 %v40, 2147483648
    %v57 = vxor.u32 %v41, 2147483648
    %v58 = vxor.u32 %v42, 2147483648
    %v59 = vxor.u32 %v43, 2147483648
    %v60 = vxor.u32 %v44, 2147483648
    %v61 = vxor.u32 %v45, 2147483648
    %v62 = vxor.u32 %v46, 2147483648
    %v63 = vmul.f32 %v55, 1.442695
    %v64 = vpow.pop %v63
    %v65 = vmul.f32 %v56, 1.442695
    %v66 = vpow.pop %v65
    %v67 = vmul.f32 %v57, 1.442695
    %v68 = vpow.pop %v67
    %v69 = vmul.f32 %v58, 1.442695
    %v70 = vpow.pop %v69
    %v71 = vmul.f32 %v59, 1.442695
    %v72 = vpow.pop %v71
    %v73 = vmul.f32 %v60, 1.442695
    %v74 = vpow.pop %v73
    %v75 = vmul.f32 %v61, 1.442695
    %v76 = vpow.pop %v75
    %v77 = vmul.f32 %v62, 1.442695
    %v78 = vpow.pop %v77
    %v79 = vadd.f32 %v64, 1.0
    %v80 = vadd.f32 %v66, 1.0
    %v81 = vadd.f32 %v68, 1.0
    %v82 = vadd.f32 %v70, 1.0
    %v83 = vadd.f32 %v72, 1.0
    %v84 = vadd.f32 %v74, 1.0
    %v85 = vadd.f32 %v76, 1.0
    %v86 = vadd.f32 %v78, 1.0
    %v87 = vrcp.pop %v79
    %v88 = vmul.f32 1.0, %v87
    %v89 = vrcp.pop %v80
    %v90 = vmul.f32 1.0, %v89
    %v91 = vrcp.pop %v81
    %v92 = vmul.f32 1.0, %v91
    %v93 = vrcp.pop %v82
    %v94 = vmul.f32 1.0, %v93
    %v95 = vrcp.pop %v83
    %v96 = vmul.f32 1.0, %v95
    %v97 = vrcp.pop %v84
    %v98 = vmul.f32 1.0, %v97
    %v99 = vrcp.pop %v85
    %v100 = vmul.f32 1.0, %v99
    %v101 = vrcp.pop %v86
    %v102 = vmul.f32 1.0, %v101
    %v103 = vadd.f32 %v88, %v90
    %104 = vadd.xlane.f32.xlu0 %v103
    %v105 = vpop.xlane.xlu0 %104
    %v106 = vadd.f32 %v92, %v94
    %107 = vadd.xlane.f32.xlu0 %v106
    %v108 = vpop.xlane.xlu0 %107
    %v109 = vadd.f32 %v96, %v98
    %110 = vadd.xlane.f32.xlu0 %v109
    %v111 = vpop.xlane.xlu0 %110
    %v112 = vadd.f32 %v100, %v102
    %113 = vadd.xlane.f32.xlu0 %v112
    %v114 = vpop.xlane.xlu0 %113
    %v115 = vadd.f32 %v105, 1e-06
    %v116 = vadd.f32 %v108, 1e-06
    %v117 = vadd.f32 %v111, 1e-06
    %v118 = vadd.f32 %v114, 1e-06
    %v119 = vadd.f32 %v47, %v48
    %120 = vadd.xlane.f32.xlu0 %v119
    %v121 = vpop.xlane.xlu0 %120
    %v122 = vadd.f32 %v49, %v50
    %123 = vadd.xlane.f32.xlu0 %v122
    %v124 = vpop.xlane.xlu0 %123
    %v125 = vadd.f32 %v51, %v52
    %126 = vadd.xlane.f32.xlu0 %v125
    %v127 = vpop.xlane.xlu0 %126
    %v128 = vadd.f32 %v53, %v54
    %129 = vadd.xlane.f32.xlu0 %v128
    %v130 = vpop.xlane.xlu0 %129
    %v131 = vadd.f32 %v121, 1e-06
    %v132 = vadd.f32 %v124, 1e-06
    %v133 = vadd.f32 %v127, 1e-06
    %v134 = vadd.f32 %v130, 1e-06
    %v135 = vmul.f32 %v47, %v88
    %v136 = vmul.f32 %v48, %v90
    %v137 = vmul.f32 %v49, %v92
    %v138 = vmul.f32 %v50, %v94
    %v139 = vmul.f32 %v51, %v96
    %v140 = vmul.f32 %v52, %v98
    %v141 = vmul.f32 %v53, %v100
    %v142 = vmul.f32 %v54, %v102
    %v143 = vadd.f32 %v135, %v136
    %144 = vadd.xlane.f32.xlu0 %v143
    %v145 = vpop.xlane.xlu0 %144
    %v146 = vadd.f32 %v137, %v138
    %147 = vadd.xlane.f32.xlu0 %v146
    %v148 = vpop.xlane.xlu0 %147
    %v149 = vadd.f32 %v139, %v140
    %150 = vadd.xlane.f32.xlu0 %v149
    %v151 = vpop.xlane.xlu0 %150
    %v152 = vadd.f32 %v141, %v142
    %153 = vadd.xlane.f32.xlu0 %v152
    %v154 = vpop.xlane.xlu0 %153
    %v155 = vrcp.pop %v115
    %v156 = vmul.f32 %v145, %v155
    %v157 = vrcp.pop %v116
    %v158 = vmul.f32 %v148, %v157
    %v159 = vrcp.pop %v117
    %v160 = vmul.f32 %v151, %v159
    %v161 = vrcp.pop %v118
    %v162 = vmul.f32 %v154, %v161
    %v163 = vrcp.pop %v131
    %v164 = vmul.f32 %v145, %v163
    %v165 = vrcp.pop %v132
    %v166 = vmul.f32 %v148, %v165
    %v167 = vrcp.pop %v133
    %v168 = vmul.f32 %v151, %v167
    %v169 = vrcp.pop %v134
    %v170 = vmul.f32 %v154, %v169
    %v171 = vmul.f32 %v156, 2.0
    %v172 = vmul.f32 %v158, 2.0
    %v173 = vmul.f32 %v160, 2.0
    %v174 = vmul.f32 %v162, 2.0
    %v175 = vmul.f32 %v171, %v164
    %v176 = vmul.f32 %v172, %v166
    %v177 = vmul.f32 %v173, %v168
    %v178 = vmul.f32 %v174, %v170
    %v179 = vadd.f32 %v156, %v164
    %v180 = vadd.f32 %v158, %v166
    %v181 = vadd.f32 %v160, %v168
    %v182 = vadd.f32 %v162, %v170
    %v183 = vadd.f32 %v179, 1e-06
    %v184 = vadd.f32 %v180, 1e-06
    %v185 = vadd.f32 %v181, 1e-06
    %v186 = vadd.f32 %v182, 1e-06
    %v187 = vrcp.pop %v183
    %v188 = vmul.f32 %v175, %v187
    %v189 = vrcp.pop %v184
    %v190 = vmul.f32 %v176, %v189
    %v191 = vrcp.pop %v185
    %v192 = vmul.f32 %v177, %v191
    %v193 = vrcp.pop %v186
    %v194 = vmul.f32 %v178, %v193
    %vm195 = vcmask 7168
    %196 = vst.msk [vmem:[%s2] sm:$0xff] %vm195, %v188
    %197 = vst.msk [vmem:[%s2 + $0x8] sm:$0xff] %vm195, %v190
    %198 = vst.msk [vmem:[%s2 + $0x10] sm:$0xff] %vm195, %v192
    %199 = vst.msk [vmem:[%s2 + $0x18] sm:$0xff] %vm195, %v194
    // Predicated region
    $region18: #{tpu_custom_call.1} parent=1 // pred_check
      _
    $region19: #{tpu_custom_call.1} parent=1 // pred_check_branch
      %201 = sbr.rel (0) target = $region21
    $region20: #{tpu_custom_call.1} parent=1 // pred_region
      _
    $region21: #{tpu_custom_call.1} parent=1 // pred_fallthru
      _
    // Predicated region
    $region22: #{tpu_custom_call.1} parent=1 // pred_check
      _
    $region23: #{tpu_custom_call.1} parent=1 // pred_check_branch
      %203 = sbr.rel (0) target = $region25
    $region24: #{tpu_custom_call.1} parent=1 // pred_region
      _
    $region25: #{tpu_custom_call.1} parent=1 // pred_fallthru
      _
    %204 = vsyncpa [#allocation3], 1
    %205 = vsyncpa [#allocation5], 1

</llo_original>
